<compile_context>
chip_gen: v7x
topology: tpu7x:2x2x1
jax: 0.10.0
libtpu: 0.0.40
codegen_flags: <defaults>
</compile_context>

<pallas_src>
import jax
import jax.numpy as jnp
from jax.experimental import pallas as pl
from jax.experimental.pallas import tpu as pltpu

LANE = 128
SMALL_BATCH = 256      # below this, one grid step (per-step overhead dominates)
MAX_BATCH_TILE = 1024  # rows per grid step once the batch grows


def _round_up(x, m):
    return ((x + m - 1) // m) * m


def dens_net_kernel(x1_ref, x2_ref, w_ref, b_ref, o1_ref, o2_ref):
    """relu(x @ W_fused + b_fused) for both branches via ONE MXU dot."""
    tm = x1_ref.shape[0]
    x = jnp.concatenate([x1_ref[...], x2_ref[...]], axis=0)       # (2*tm, Fin) bf16
    h = jnp.dot(x, w_ref[...], preferred_element_type=jnp.float32)  # f32 accum
    y = jnp.maximum(h + b_ref[...], 0.0)
    o1_ref[...] = y[:tm].astype(o1_ref.dtype)
    o2_ref[...] = y[tm:].astype(o2_ref.dtype)


def fuse_params(params):
    """Collapse the 3 affine layers into one fused (W, b), lane-padded to 128.

    Fusion is done in f32 (avoids compounding bf16 rounding), then the weight
    is cast to bf16 once.  The bias stays f32: it is tiny and adds directly to
    the f32 MXU accumulator.

    Returns (w_fused bf16 [in, out_pad], b_fused f32 [1, out_pad], out_dim).
    """
    w1, b1 = params["w1"], params["b1"]
    w2, b2 = params["w2"], params["b2"]
    w3, b3 = params["w3"], params["b3"]
    w = w1 @ w2 @ w3                       # [in, out]  (f32)
    b = b1 @ w2 @ w3 + b2 @ w3 + b3        # [1, out]   (f32)
    out_dim = w.shape[1]
    out_pad = _round_up(out_dim, LANE)
    if out_pad != out_dim:
        # zero pad => padded output lanes are relu(0)=0 and get sliced off
        w = jnp.pad(w, ((0, 0), (0, out_pad - out_dim)))
        b = jnp.pad(b, ((0, 0), (0, out_pad - out_dim)))
    return w.astype(jnp.bfloat16), b.astype(jnp.float32), out_dim


def _pick_batch_tile(B):
    if B <= SMALL_BATCH:
        return B                       # single grid step; full-extent block
    # >= 2 grid steps so the "parallel" axis can shard across v7x's two TCs.
    return min(MAX_BATCH_TILE, _round_up(pl.cdiv(B, 2), 8))


def _build_call(B, Fin, n_pad, tm, out_dtype, single_buffer_consts):
    const_kw = {}
    if single_buffer_consts:
        # Constant operands: block index never changes, so the default double
        # buffer is pure VMEM waste — request a single buffer.
        const_kw = dict(pipeline_mode=pl.Buffered(1))

    x_spec = pl.BlockSpec((tm, Fin), lambda i: (i, 0))
    w_spec = pl.BlockSpec((Fin, n_pad), lambda i: (0, 0), **const_kw)
    b_spec = pl.BlockSpec((1, n_pad), lambda i: (0, 0), **const_kw)
    o_spec = pl.BlockSpec((tm, n_pad), lambda i: (i, 0))  # lane-dense output slab

    out_shape = jax.ShapeDtypeStruct((B, n_pad), out_dtype)

    return pl.pallas_call(
        dens_net_kernel,
        out_shape=(out_shape, out_shape),
        grid_spec=pltpu.PrefetchScalarGridSpec(
            num_scalar_prefetch=0,
            grid=(pl.cdiv(B, tm),),
            in_specs=[x_spec, x_spec, w_spec, b_spec],
            out_specs=(o_spec, o_spec),
        ),
        compiler_params=pltpu.CompilerParams(
            dimension_semantics=("parallel",),   # batch tiles shard across TCs (v7x)
            vmem_limit_bytes=32 * 1024 * 1024,
        ),
    )


def dens_net_forward(x1, x2, fused_w, fused_b, out_dim, out_dtype=jnp.float32):
    """Applies the fused dense net + ReLU to x1 and x2 (mirrors dens_Net.forward)."""
    assert x1.shape == x2.shape, "branches assumed to share batch shape"
    # TODO(synk): support differing batch sizes for x1/x2 (two launches needed).
    B, Fin = x1.shape
    n_pad = fused_w.shape[1]
    tm = _pick_batch_tile(B)

    # bf16 activations: MXU-native and halves input DMA bytes (accumulate f32).
    x1b = x1.astype(jnp.bfloat16)
    x2b = x2.astype(jnp.bfloat16)

    try:
        call = _build_call(B, Fin, n_pad, tm, out_dtype, single_buffer_consts=True)
        o1, o2 = call(x1b, x2b, fused_w, fused_b)
    except Exception:
        # pipeline_mode=pl.Buffered(1) not supported on this jax -> default buffers.
        call = _build_call(B, Fin, n_pad, tm, out_dtype, single_buffer_consts=False)
        o1, o2 = call(x1b, x2b, fused_w, fused_b)

    if n_pad == out_dim:
        return o1, o2
    # NOTE: for tiny out_dim the best plan is to keep the padded (B, n_pad)
    # slab and fuse this column slice into the consumer; we slice here only to
    # match the module's output contract.
    return o1[:, :out_dim], o2[:, :out_dim]


def init_params(key, inputsize, hidden, outputsize):
    """Deterministic PyTorch-Linear-style init: U(-1/sqrt(fan_in), 1/sqrt(fan_in))."""
    ks = jax.random.split(key, 6)

    def lin(kw, kb, fan_in, fan_out):
        bound = 1.0 / jnp.sqrt(jnp.float32(fan_in))
        w = jax.random.uniform(kw, (fan_in, fan_out), jnp.float32, -bound, bound)
        b = jax.random.uniform(kb, (1, fan_out), jnp.float32, -bound, bound)
        return w, b

    w1, b1 = lin(ks[0], ks[1], inputsize, hidden)
    w2, b2 = lin(ks[2], ks[3], hidden, hidden)
    w3, b3 = lin(ks[4], ks[5], hidden, outputsize)
    return dict(w1=w1, b1=b1, w2=w2, b2=b2, w3=w3, b3=b3)


if __name__ == "__main__":
    # Small shapes consistent with the module's forward:
    #   dens_inputsize=32, dens_hiddensize=64, dens_outputsize=16, batch=8
    batch, inputsize, hidden, outputsize = 8, 32, 64, 16

    key = jax.random.PRNGKey(0)
    kp, k1, k2 = jax.random.split(key, 3)
    params = init_params(kp, inputsize, hidden, outputsize)

    x1 = jax.random.normal(k1, (batch, inputsize), jnp.float32)
    x2 = jax.random.normal(k2, (batch, inputsize), jnp.float32)

    # Fuse the affine chain once (outside the kernel call path), f32 then bf16.
    fused_w, fused_b, out_dim = fuse_params(params)
    fused_w, fused_b = jax.block_until_ready((fused_w, fused_b))

    y1, y2 = dens_net_forward(x1, x2, fused_w, fused_b, out_dim)
    jax.block_until_ready((y1, y2))

    # Reference 1: exact same bf16 fused weights -> tight tolerance (kernel mechanics).
    def ref_fused(x):
        h = jnp.dot(x.astype(jnp.bfloat16), fused_w,
                    preferred_element_type=jnp.float32) + fused_b
        return jnp.maximum(h, 0.0)[:, :out_dim]

    # Reference 2: pure-f32 layer-by-layer module semantics (eval-mode dropout =
    # identity); loose tolerance accounts only for bf16 weight/activation rounding.
    def ref_f32(x):
        h = x @ params["w1"] + params["b1"]
        h = h @ params["w2"] + params["b2"]
        h = h @ params["w3"] + params["b3"]
        return jnp.maximum(h, 0.0)

    assert y1.shape == (batch, outputsize) and y2.shape == (batch, outputsize)
    assert jnp.allclose(y1, ref_fused(x1), atol=1e-4, rtol=1e-4)
    assert jnp.allclose(y2, ref_fused(x2), atol=1e-4, rtol=1e-4)
    assert jnp.allclose(y1, ref_f32(x1), atol=2e-2, rtol=2e-2)
    assert jnp.allclose(y2, ref_f32(x2), atol=2e-2, rtol=2e-2)

    print("KERNEL_OK")
</pallas_src>

<mosaic_0001>
module attributes {stable_mosaic.version = 11 : i64} {
  func.func @dens_net_kernel(%arg0: i32, %arg1: memref<8x32xbf16, #tpu.memory_space<vmem>>, %arg2: memref<8x32xbf16, #tpu.memory_space<vmem>>, %arg3: memref<32x128xbf16, #tpu.memory_space<vmem>>, %arg4: memref<1x128xf32, #tpu.memory_space<vmem>>, %arg5: memref<8x128xf32, #tpu.memory_space<vmem>>, %arg6: memref<8x128xf32, #tpu.memory_space<vmem>>) attributes {dimension_semantics = [#tpu.dimension_semantics<parallel>], iteration_bounds = array<i64: 1>, scalar_prefetch = 0 : i64, scratch_operands = 0 : i64, tpu.core_type = #tpu.core_type<tc>, window_params = [{transform_indices = @transform_0, window_bounds = array<i64: 8, 32>}, {transform_indices = @transform_1, window_bounds = array<i64: 8, 32>}, {pipeline_mode = #tpu.pipeline_mode<synchronous>, transform_indices = @transform_2, window_bounds = array<i64: 32, 128>}, {pipeline_mode = #tpu.pipeline_mode<synchronous>, transform_indices = @transform_3, window_bounds = array<i64: 1, 128>}, {transform_indices = @transform_4, window_bounds = array<i64: 8, 128>}, {transform_indices = @transform_5, window_bounds = array<i64: 8, 128>}]} {
    %c0 = arith.constant 0 : index
    %c0_0 = arith.constant 0 : index
    %0 = vector.load %arg1[%c0, %c0_0] : memref<8x32xbf16, #tpu.memory_space<vmem>>, vector<8x32xbf16>
    %c0_1 = arith.constant 0 : index
    %c0_2 = arith.constant 0 : index
    %1 = vector.load %arg2[%c0_1, %c0_2] : memref<8x32xbf16, #tpu.memory_space<vmem>>, vector<8x32xbf16>
    %2 = tpu.concatenate %0, %1 in 0 : vector<8x32xbf16>, vector<8x32xbf16> -> vector<16x32xbf16>
    %c0_3 = arith.constant 0 : index
    %c0_4 = arith.constant 0 : index
    %3 = vector.load %arg3[%c0_3, %c0_4] : memref<32x128xbf16, #tpu.memory_space<vmem>>, vector<32x128xbf16>
    %cst = arith.constant dense<0.000000e+00> : vector<16x128xf32>
    %4 = tpu.matmul %2, %3, %cst {dimension_numbers = #tpu.dot_dimension_numbers<[1], [0], [0], [1], [0, 0, 1, 1], [], []>} : vector<16x32xbf16>, vector<32x128xbf16>, vector<16x128xf32> -> vector<16x128xf32>
    %c0_5 = arith.constant 0 : index
    %c0_6 = arith.constant 0 : index
    %5 = vector.load %arg4[%c0_5, %c0_6] : memref<1x128xf32, #tpu.memory_space<vmem>>, vector<1x128xf32>
    %6 = vector.broadcast %5 : vector<1x128xf32> to vector<16x128xf32>
    %7 = arith.addf %4, %6 : vector<16x128xf32>
    %cst_7 = arith.constant 0.000000e+00 : f32
    %8 = vector.broadcast %cst_7 : f32 to vector<16x128xf32>
    %9 = arith.maximumf %7, %8 : vector<16x128xf32>
    %10 = vector.extract_strided_slice %9 {offsets = [0, 0], sizes = [8, 128], strides = [1, 1]} : vector<16x128xf32> to vector<8x128xf32>
    %c0_8 = arith.constant 0 : index
    %c0_9 = arith.constant 0 : index
    %11 = vector.load %arg5[%c0_8, %c0_9] : memref<8x128xf32, #tpu.memory_space<vmem>>, vector<8x128xf32>
    tpu.vector_store %arg5[%c0_8, %c0_9], %10 {strides = array<i32>} : memref<8x128xf32, #tpu.memory_space<vmem>>, vector<8x128xf32>,
    %12 = vector.extract_strided_slice %9 {offsets = [8, 0], sizes = [8, 128], strides = [1, 1]} : vector<16x128xf32> to vector<8x128xf32>
    %c0_10 = arith.constant 0 : index
    %c0_11 = arith.constant 0 : index
    %13 = vector.load %arg6[%c0_10, %c0_11] : memref<8x128xf32, #tpu.memory_space<vmem>>, vector<8x128xf32>
    tpu.vector_store %arg6[%c0_10, %c0_11], %12 {strides = array<i32>} : memref<8x128xf32, #tpu.memory_space<vmem>>, vector<8x128xf32>,
    return
  }
  func.func @transform_0(%arg0: i32) -> (i32, i32) {
    %c0_i32 = arith.constant 0 : i32
    %c0_i32_0 = arith.constant 0 : i32
    return %arg0, %c0_i32 : i32, i32
  }
  func.func @transform_1(%arg0: i32) -> (i32, i32) {
    %c0_i32 = arith.constant 0 : i32
    %c0_i32_0 = arith.constant 0 : i32
    return %arg0, %c0_i32 : i32, i32
  }
  func.func @transform_2(%arg0: i32) -> (i32, i32) {
    %c0_i32 = arith.constant 0 : i32
    %c0_i32_0 = arith.constant 0 : i32
    %c0_i32_1 = arith.constant 0 : i32
    return %c0_i32, %c0_i32_0 : i32, i32
  }
  func.func @transform_3(%arg0: i32) -> (i32, i32) {
    %c0_i32 = arith.constant 0 : i32
    %c0_i32_0 = arith.constant 0 : i32
    %c0_i32_1 = arith.constant 0 : i32
    return %c0_i32, %c0_i32_0 : i32, i32
  }
  func.func @transform_4(%arg0: i32) -> (i32, i32) {
    %c0_i32 = arith.constant 0 : i32
    %c0_i32_0 = arith.constant 0 : i32
    return %arg0, %c0_i32 : i32, i32
  }
  func.func @transform_5(%arg0: i32) -> (i32, i32) {
    %c0_i32 = arith.constant 0 : i32
    %c0_i32_0 = arith.constant 0 : i32
    return %arg0, %c0_i32 : i32, i32
  }
}

module attributes {stable_mosaic.version = 11 : i64} {
  func.func @dens_net_kernel(%arg0: i32, %arg1: memref<8x32xbf16, #tpu.memory_space<vmem>>, %arg2: memref<8x32xbf16, #tpu.memory_space<vmem>>, %arg3: memref<32x128xbf16, #tpu.memory_space<vmem>>, %arg4: memref<1x128xf32, #tpu.memory_space<vmem>>, %arg5: memref<8x128xf32, #tpu.memory_space<vmem>>, %arg6: memref<8x128xf32, #tpu.memory_space<vmem>>) attributes {dimension_semantics = [#tpu.dimension_semantics<parallel>], iteration_bounds = array<i64: 1>, scalar_prefetch = 0 : i64, scratch_operands = 0 : i64, tpu.core_type = #tpu.core_type<tc>, window_params = [{transform_indices = @transform_0, window_bounds = array<i64: 8, 32>}, {transform_indices = @transform_1, window_bounds = array<i64: 8, 32>}, {pipeline_mode = #tpu.pipeline_mode<synchronous>, transform_indices = @transform_2, window_bounds = array<i64: 32, 128>}, {pipeline_mode = #tpu.pipeline_mode<synchronous>, transform_indices = @transform_3, window_bounds = array<i64: 1, 128>}, {transform_indices = @transform_4, window_bounds = array<i64: 8, 128>}, {transform_indices = @transform_5, window_bounds = array<i64: 8, 128>}]} {
    %c0 = arith.constant 0 : index
    %c0_0 = arith.constant 0 : index
    %0 = vector.load %arg1[%c0, %c0_0] : memref<8x32xbf16, #tpu.memory_space<vmem>>, vector<8x32xbf16>
    %c0_1 = arith.constant 0 : index
    %c0_2 = arith.constant 0 : index
    %1 = vector.load %arg2[%c0_1, %c0_2] : memref<8x32xbf16, #tpu.memory_space<vmem>>, vector<8x32xbf16>
    %2 = tpu.concatenate %0, %1 in 0 : vector<8x32xbf16>, vector<8x32xbf16> -> vector<16x32xbf16>
    %c0_3 = arith.constant 0 : index
    %c0_4 = arith.constant 0 : index
    %3 = vector.load %arg3[%c0_3, %c0_4] : memref<32x128xbf16, #tpu.memory_space<vmem>>, vector<32x128xbf16>
    %cst = arith.constant dense<0.000000e+00> : vector<16x128xf32>
    %4 = tpu.matmul %2, %3, %cst {dimension_numbers = #tpu.dot_dimension_numbers<[1], [0], [0], [1], [0, 0, 1, 1], [], []>} : vector<16x32xbf16>, vector<32x128xbf16>, vector<16x128xf32> -> vector<16x128xf32>
    %c0_5 = arith.constant 0 : index
    %c0_6 = arith.constant 0 : index
    %5 = vector.load %arg4[%c0_5, %c0_6] : memref<1x128xf32, #tpu.memory_space<vmem>>, vector<1x128xf32>
    %6 = vector.broadcast %5 : vector<1x128xf32> to vector<16x128xf32>
    %7 = arith.addf %4, %6 : vector<16x128xf32>
    %cst_7 = arith.constant 0.000000e+00 : f32
    %8 = vector.broadcast %cst_7 : f32 to vector<16x128xf32>
    %9 = arith.maximumf %7, %8 : vector<16x128xf32>
    %10 = vector.extract_strided_slice %9 {offsets = [0, 0], sizes = [8, 128], strides = [1, 1]} : vector<16x128xf32> to vector<8x128xf32>
    %c0_8 = arith.constant 0 : index
    %c0_9 = arith.constant 0 : index
    %11 = vector.load %arg5[%c0_8, %c0_9] : memref<8x128xf32, #tpu.memory_space<vmem>>, vector<8x128xf32>
    tpu.vector_store %arg5[%c0_8, %c0_9], %10 {strides = array<i32>} : memref<8x128xf32, #tpu.memory_space<vmem>>, vector<8x128xf32>,
    %12 = vector.extract_strided_slice %9 {offsets = [8, 0], sizes = [8, 128], strides = [1, 1]} : vector<16x128xf32> to vector<8x128xf32>
    %c0_10 = arith.constant 0 : index
    %c0_11 = arith.constant 0 : index
    %13 = vector.load %arg6[%c0_10, %c0_11] : memref<8x128xf32, #tpu.memory_space<vmem>>, vector<8x128xf32>
    tpu.vector_store %arg6[%c0_10, %c0_11], %12 {strides = array<i32>} : memref<8x128xf32, #tpu.memory_space<vmem>>, vector<8x128xf32>,
    return
  }
  func.func @transform_0(%arg0: i32) -> (i32, i32) {
    %c0_i32 = arith.constant 0 : i32
    %c0_i32_0 = arith.constant 0 : i32
    return %arg0, %c0_i32 : i32, i32
  }
  func.func @transform_1(%arg0: i32) -> (i32, i32) {
    %c0_i32 = arith.constant 0 : i32
    %c0_i32_0 = arith.constant 0 : i32
    return %arg0, %c0_i32 : i32, i32
  }
  func.func @transform_2(%arg0: i32) -> (i32, i32) {
    %c0_i32 = arith.constant 0 : i32
    %c0_i32_0 = arith.constant 0 : i32
    %c0_i32_1 = arith.constant 0 : i32
    return %c0_i32, %c0_i32_0 : i32, i32
  }
  func.func @transform_3(%arg0: i32) -> (i32, i32) {
    %c0_i32 = arith.constant 0 : i32
    %c0_i32_0 = arith.constant 0 : i32
    %c0_i32_1 = arith.constant 0 : i32
    return %c0_i32, %c0_i32_0 : i32, i32
  }
  func.func @transform_4(%arg0: i32) -> (i32, i32) {
    %c0_i32 = arith.constant 0 : i32
    %c0_i32_0 = arith.constant 0 : i32
    return %arg0, %c0_i32 : i32, i32
  }
  func.func @transform_5(%arg0: i32) -> (i32, i32) {
    %c0_i32 = arith.constant 0 : i32
    %c0_i32_0 = arith.constant 0 : i32
    return %arg0, %c0_i32 : i32, i32
  }
}

</mosaic_0001>

<llo_original>
// kernel: tpu_custom_call.1
$region0: #{tpu_custom_call.1}
  #allocation0 [shape = 'u32[]', space=smem, size = 0x4, offset = 0x4, fixed_abs, tag = 'smem constant byte address 0x4 - core index']
  #allocation1 [shape = 'u32[144,128]{1,0:T(1,128)}', space=vmem, size = 0x12000, scoped, tag = 'internal scratch']
  %s0 = inlined_call_operand.hbm [shape: bf16[8,32], index: 0, kind: input, shape index: {}]
  %s1 = inlined_call_operand.hbm [shape: bf16[8,32], index: 1, kind: input, shape index: {}]
  %s2 = inlined_call_operand.hbm [shape: bf16[32,128], index: 2, kind: input, shape index: {}]
  %s3 = inlined_call_operand.vmem [shape: f32[1,128], index: 3, kind: input, shape index: {}]
  %s4 = inlined_call_operand.hbm [shape: f32[8,128], index: 4, kind: output, shape index: {0}]
  %s5 = inlined_call_operand.hbm [shape: f32[8,128], index: 5, kind: output, shape index: {1}]
  %6 = xla_tuple %s4, %s5
  %s7 = sld [smem:[#allocation0]]
  $region46: #{tpu_custom_call.1} parent=0
    _
  %s9 = ssub.s32 1, %s7
  %s10 = scalar_select 0, %s9, %s7
  $region1: #{tpu_custom_call.1} parent=0
    #allocation2 [shape = 'u8[2048]{0}', space=vmem, size = 0x800, scoped, tag = 'input window, operand 0, single buffered']
    #allocation3 [shape = 's32[1]{0}', space=sflag, size = 0x4, scoped, tag = 'scoped memory for tpu_custom_call.1']
    #allocation4 [shape = 's32[1]{0}', space=sflag, size = 0x4, scoped, tag = 'scoped memory for tpu_custom_call.1']
    #allocation5 [shape = 'u8[2048]{0}', space=vmem, size = 0x800, scoped, tag = 'input window, operand 1, single buffered']
    #allocation6 [shape = 's32[1]{0}', space=sflag, size = 0x4, scoped, tag = 'scoped memory for tpu_custom_call.1']
    #allocation7 [shape = 'u8[8192]{0}', space=vmem, size = 0x2000, scoped, tag = 'input window, operand 2, single buffered']
    #allocation8 [shape = 'u8[4096]{0}', space=vmem, size = 0x1000, scoped, tag = 'output window, operand 0, single buffered']
    #allocation9 [shape = 'u8[4096]{0}', space=vmem, size = 0x1000, scoped, tag = 'output window, operand 1, single buffered']
    #allocation10 [shape = 's32[1]{0}', space=sflag, size = 0x4, scoped, tag = 'scoped memory for tpu_custom_call.1']
    %11 = vsyncpa [#allocation3], 0
    %12 = vsyncpa [#allocation6], 0
    %13 = vsyncpa [#allocation4], 0
    %14 = vsyncpa [#allocation10], 0
    // Predicated region
    $region2: #{tpu_custom_call.1} parent=1 // pred_check
      _
    $region3: #{tpu_custom_call.1} parent=1 // pred_check_branch
      %16 = sbr.rel (0) target = $region5
    $region4: #{tpu_custom_call.1} parent=1 // pred_region
      %s18 = ssub.s32 64, 64
      %19 = vsyncadd [#allocation3], %s18
      %s21 = sshll.u32 [#allocation2], 4
      %s22 = int_to_ptr.vmem [resolvable:$true] %s21
      %24 = dma.hbm_to_vmem [thread:$0]  %s0, 64, %s22, [#allocation3]
    $region5: #{tpu_custom_call.1} parent=1 // pred_fallthru
      _
    // Predicated region
    $region6: #{tpu_custom_call.1} parent=1 // pred_check
      _
    $region7: #{tpu_custom_call.1} parent=1 // pred_check_branch
      %26 = sbr.rel (0) target = $region9
    $region8: #{tpu_custom_call.1} parent=1 // pred_region
      %s28 = ssub.s32 64, 64
      %29 = vsyncadd [#allocation6], %s28
      %s31 = sshll.u32 [#allocation5], 4
      %s32 = int_to_ptr.vmem [resolvable:$true] %s31
      %34 = dma.hbm_to_vmem [thread:$0]  %s1, 64, %s32, [#allocation6]
    $region9: #{tpu_custom_call.1} parent=1 // pred_fallthru
      _
    // Predicated region
    $region10: #{tpu_custom_call.1} parent=1 // pred_check
      _
    $region11: #{tpu_custom_call.1} parent=1 // pred_check_branch
      %36 = sbr.rel (0) target = $region13
    $region12: #{tpu_custom_call.1} parent=1 // pred_region
      %s38 = ssub.s32 256, 256
      %39 = vsyncadd [#allocation6], %s38
      %s40 = sshll.u32 [#allocation7], 4
      %s41 = int_to_ptr.vmem [resolvable:$true] %s40
      %46 = dma.hbm_to_vmem [thread:$0]  %s2, 256, %s41, [#allocation6], 64, 64, 4
    $region13: #{tpu_custom_call.1} parent=1 // pred_fallthru
      _
    // Predicated region
    $region14: #{tpu_custom_call.1} parent=1 // pred_check
      _
    $region15: #{tpu_custom_call.1} parent=1 // pred_check_branch
      %48 = sbr.rel (0) target = $region17
    $region16: #{tpu_custom_call.1} parent=1 // pred_region
      _
    $region17: #{tpu_custom_call.1} parent=1 // pred_fallthru
      _
    // Predicated region
    $region18: #{tpu_custom_call.1} parent=1 // pred_check
      _
    $region19: #{tpu_custom_call.1} parent=1 // pred_check_branch
      %50 = sbr.rel (0) target = $region21
    $region20: #{tpu_custom_call.1} parent=1 // pred_region
      %51 = dma.done [#allocation3], 64
    $region21: #{tpu_custom_call.1} parent=1 // pred_fallthru
      _
    // Predicated region
    $region22: #{tpu_custom_call.1} parent=1 // pred_check
      _
    $region23: #{tpu_custom_call.1} parent=1 // pred_check_branch
      %53 = sbr.rel (0) target = $region25
    $region24: #{tpu_custom_call.1} parent=1 // pred_region
      %54 = dma.done [#allocation6], 64
    $region25: #{tpu_custom_call.1} parent=1 // pred_fallthru
      _
    // Predicated region
    $region26: #{tpu_custom_call.1} parent=1 // pred_check
      _
    $region27: #{tpu_custom_call.1} parent=1 // pred_check_branch
      %56 = sbr.rel (0) target = $region29
    $region28: #{tpu_custom_call.1} parent=1 // pred_region
      %57 = dma.done [#allocation6], 256
    $region29: #{tpu_custom_call.1} parent=1 // pred_fallthru
      _
    %v59 = vld [vmem:[#allocation2] sm:$0xf]
    %v60 = vld [vmem:[#allocation5] sm:$0xf]
    %v62 = vunpack.c.l.b16 %v60
    %v63 = vpack.c.b16 %v62, %v62
    %vm64 = vcmask 1043456
    %v67 = vsel %vm64, %v59, %v63
    %v68 = vld [vmem:[#allocation7] sm:$0xf]
    %v69 = vld [vmem:[#allocation7 + $0x4] sm:$0xf]
    %v70 = vld [vmem:[#allocation7 + $0x8] sm:$0xf]
    %v71 = vld [vmem:[#allocation7 + $0xc] sm:$0xf]
    %v72 = vld [vmem:[%s3] sm:$0x1]
    %v74 = vlaneseq
    %v75 = vshrl.u32 %v74, 7
    %v76 = vsub.s32 0, %v75
    %v77 = vrot.slane %v72, %v76
    %v83 = vunpack.c.l.b16 %v68
    %v84 = vunpack.c.l.b16 %v69
    %v85 = vunpack.c.l.b16 %v70
    %v86 = vunpack.c.l.b16 %v71
    %v87 = vpack.c.b16 %v84, %v83
    %v88 = vpack.c.b16 %v86, %v85
    %vm91 = vcmask 261120
    %v92 = vsel %vm91, %v67, 0
    %94 = vmatprep.subr.bf16.mxu0 0
    %95 = vmatpush1.bf16.msra.mxu0 %v87
    %96 = vmatprep.subr.bf16.mxu0 0
    %97 = vmatpush1.bf16.msra.mxu0 %v88
    %98 = vmatprep.subr.bf16.mxu0 0
    %99 = vmatpush1.bf16.msra.mxu0 0
    %100 = vmatprep.subr.bf16.mxu0 0
    %101 = vmatpush1.bf16.msra.mxu0 0
    %102 = vmatprep.subr.bf16.mxu0 0
    %103 = vmatpush1.bf16.msra.mxu0 0
    %104 = vmatprep.subr.bf16.mxu0 0
    %105 = vmatpush1.bf16.msra.mxu0 0
    %106 = vmatprep.subr.bf16.mxu0 0
    %107 = vmatpush1.bf16.msra.mxu0 0
    %108 = vmatprep.subr.bf16.mxu0 0
    %109 = vmatpush1.bf16.msra.mxu0 0
    %110 = vmatprep.subr.bf16.mxu0 0
    %111 = vmatpush1.bf16.msra.mxu0 0
    %112 = vmatprep.subr.bf16.mxu0 0
    %113 = vmatpush1.bf16.msra.mxu0 0
    %114 = vmatprep.subr.bf16.mxu0 0
    %115 = vmatpush1.bf16.msra.mxu0 0
    %116 = vmatprep.subr.bf16.mxu0 0
    %117 = vmatpush1.bf16.msra.mxu0 0
    %118 = vmatprep.subr.bf16.mxu0 0
    %119 = vmatpush1.bf16.msra.mxu0 0
    %120 = vmatprep.subr.bf16.mxu0 0
    %121 = vmatpush1.bf16.msra.mxu0 0
    %122 = vmatprep.subr.bf16.mxu0 0
    %123 = vmatpush1.bf16.msra.mxu0 0
    %124 = vmatprep.subr.bf16.mxu0 0
    %125 = vmatpush1.bf16.msra.mxu0 0
    %126 = vmatprep.mubr.bf16.mxu0 0
    %127 = vmatmul.mubr.bf16.gmra.mrb[0].mxu0 %v92
    %v128 = vpop.f32.mrb[0].mxu0
    %v129 = vadd.f32 %v77, %v128
    %v130 = vpop.f32.mrb[0].mxu0
    %v131 = vpop.f32.mrb[0].mxu0
    %v132 = vadd.f32 %v77, %v131
    %v133 = vpop.f32.mrb[0].mxu0
    %134 = vdwg.mxu0
    %v135 = vmax.f32 %v129, 0.0
    %v136 = vmax.f32 %v132, 0.0
    %137 = vst [vmem:[#allocation8] sm:$0xff] %v135
    %138 = vst [vmem:[#allocation9] sm:$0xff] %v136
    // Predicated region
    $region30: #{tpu_custom_call.1} parent=1 // pred_check
      _
    $region31: #{tpu_custom_call.1} parent=1 // pred_check_branch
      %140 = sbr.rel (0) target = $region33
    $region32: #{tpu_custom_call.1} parent=1 // pred_region
      %s142 = ssub.s32 128, 128
      %143 = vsyncadd [#allocation4], %s142
      %s145 = sshll.u32 [#allocation8], 4
      %s146 = int_to_ptr.vmem [resolvable:$true] %s145
      %148 = dma.vmem_to_hbm [thread:$0]  %s146, 128, %s4, [#allocation4]
    $region33: #{tpu_custom_call.1} parent=1 // pred_fallthru
      _
    // Predicated region
    $region34: #{tpu_custom_call.1} parent=1 // pred_check
      _
    $region35: #{tpu_custom_call.1} parent=1 // pred_check_branch
      %150 = sbr.rel (0) target = $region37
    $region36: #{tpu_custom_call.1} parent=1 // pred_region
      %s152 = ssub.s32 128, 128
      %153 = vsyncadd [#allocation10], %s152
      %s155 = sshll.u32 [#allocation9], 4
      %s156 = int_to_ptr.vmem [resolvable:$true] %s155
      %158 = dma.vmem_to_hbm [thread:$0]  %s156, 128, %s5, [#allocation10]
    $region37: #{tpu_custom_call.1} parent=1 // pred_fallthru
      _
    // Predicated region
    $region38: #{tpu_custom_call.1} parent=1 // pred_check
      _
    $region39: #{tpu_custom_call.1} parent=1 // pred_check_branch
      %160 = sbr.rel (0) target = $region41
    $region40: #{tpu_custom_call.1} parent=1 // pred_region
      %161 = dma.done [#allocation4], 128
    $region41: #{tpu_custom_call.1} parent=1 // pred_fallthru
      _
    // Predicated region
    $region42: #{tpu_custom_call.1} parent=1 // pred_check
      _
    $region43: #{tpu_custom_call.1} parent=1 // pred_check_branch
      %163 = sbr.rel (0) target = $region45
    $region44: #{tpu_custom_call.1} parent=1 // pred_region
      %164 = dma.done [#allocation10], 128
    $region45: #{tpu_custom_call.1} parent=1 // pred_fallthru
      _
    %165 = vsyncpa [#allocation3], 1
    %166 = vsyncpa [#allocation6], 1
    %167 = vsyncpa [#allocation4], 1
    %168 = vsyncpa [#allocation10], 1

// kernel: tpu_custom_call.1
$region0: #{tpu_custom_call.1}
  #allocation0 [shape = 'u32[]', space=smem, size = 0x4, offset = 0x4, fixed_abs, tag = 'smem constant byte address 0x4 - core index']
  #allocation1 [shape = 'u32[144,128]{1,0:T(1,128)}', space=vmem, size = 0x12000, scoped, tag = 'internal scratch']
  %s0 = inlined_call_operand.hbm [shape: bf16[8,32], index: 0, kind: input, shape index: {}]
  %s1 = inlined_call_operand.hbm [shape: bf16[8,32], index: 1, kind: input, shape index: {}]
  %s2 = inlined_call_operand.hbm [shape: bf16[32,128], index: 2, kind: input, shape index: {}]
  %s3 = inlined_call_operand.vmem [shape: f32[1,128], index: 3, kind: input, shape index: {}]
  %s4 = inlined_call_operand.hbm [shape: f32[8,128], index: 4, kind: output, shape index: {0}]
  %s5 = inlined_call_operand.hbm [shape: f32[8,128], index: 5, kind: output, shape index: {1}]
  %6 = xla_tuple %s4, %s5
  %s7 = sld [smem:[#allocation0]]
  $region46: #{tpu_custom_call.1} parent=0
    _
  %s9 = ssub.s32 1, %s7
  %s10 = scalar_select 0, %s9, %s7
  $region1: #{tpu_custom_call.1} parent=0
    #allocation2 [shape = 'u8[2048]{0}', space=vmem, size = 0x800, scoped, tag = 'input window, operand 0, single buffered']
    #allocation3 [shape = 's32[1]{0}', space=sflag, size = 0x4, scoped, tag = 'scoped memory for tpu_custom_call.1']
    #allocation4 [shape = 's32[1]{0}', space=sflag, size = 0x4, scoped, tag = 'scoped memory for tpu_custom_call.1']
    #allocation5 [shape = 'u8[2048]{0}', space=vmem, size = 0x800, scoped, tag = 'input window, operand 1, single buffered']
    #allocation6 [shape = 's32[1]{0}', space=sflag, size = 0x4, scoped, tag = 'scoped memory for tpu_custom_call.1']
    #allocation7 [shape = 'u8[8192]{0}', space=vmem, size = 0x2000, scoped, tag = 'input window, operand 2, single buffered']
    #allocation8 [shape = 'u8[4096]{0}', space=vmem, size = 0x1000, scoped, tag = 'output window, operand 0, single buffered']
    #allocation9 [shape = 'u8[4096]{0}', space=vmem, size = 0x1000, scoped, tag = 'output window, operand 1, single buffered']
    #allocation10 [shape = 's32[1]{0}', space=sflag, size = 0x4, scoped, tag = 'scoped memory for tpu_custom_call.1']
    %11 = vsyncpa [#allocation3], 0
    %12 = vsyncpa [#allocation6], 0
    %13 = vsyncpa [#allocation4], 0
    %14 = vsyncpa [#allocation10], 0
    // Predicated region
    $region2: #{tpu_custom_call.1} parent=1 // pred_check
      _
    $region3: #{tpu_custom_call.1} parent=1 // pred_check_branch
      %16 = sbr.rel (0) target = $region5
    $region4: #{tpu_custom_call.1} parent=1 // pred_region
      %s18 = ssub.s32 64, 64
      %19 = vsyncadd [#allocation3], %s18
      %s21 = sshll.u32 [#allocation2], 4
      %s22 = int_to_ptr.vmem [resolvable:$true] %s21
      %24 = dma.hbm_to_vmem [thread:$0]  %s0, 64, %s22, [#allocation3]
    $region5: #{tpu_custom_call.1} parent=1 // pred_fallthru
      _
    // Predicated region
    $region6: #{tpu_custom_call.1} parent=1 // pred_check
      _
    $region7: #{tpu_custom_call.1} parent=1 // pred_check_branch
      %26 = sbr.rel (0) target = $region9
    $region8: #{tpu_custom_call.1} parent=1 // pred_region
      %s28 = ssub.s32 64, 64
      %29 = vsyncadd [#allocation6], %s28
      %s31 = sshll.u32 [#allocation5], 4
      %s32 = int_to_ptr.vmem [resolvable:$true] %s31
      %34 = dma.hbm_to_vmem [thread:$0]  %s1, 64, %s32, [#allocation6]
    $region9: #{tpu_custom_call.1} parent=1 // pred_fallthru
      _
    // Predicated region
    $region10: #{tpu_custom_call.1} parent=1 // pred_check
      _
    $region11: #{tpu_custom_call.1} parent=1 // pred_check_branch
      %36 = sbr.rel (0) target = $region13
    $region12: #{tpu_custom_call.1} parent=1 // pred_region
      %s38 = ssub.s32 256, 256
      %39 = vsyncadd [#allocation6], %s38
      %s40 = sshll.u32 [#allocation7], 4
      %s41 = int_to_ptr.vmem [resolvable:$true] %s40
      %46 = dma.hbm_to_vmem [thread:$0]  %s2, 256, %s41, [#allocation6], 64, 64, 4
    $region13: #{tpu_custom_call.1} parent=1 // pred_fallthru
      _
    // Predicated region
    $region14: #{tpu_custom_call.1} parent=1 // pred_check
      _
    $region15: #{tpu_custom_call.1} parent=1 // pred_check_branch
      %48 = sbr.rel (0) target = $region17
    $region16: #{tpu_custom_call.1} parent=1 // pred_region
      _
    $region17: #{tpu_custom_call.1} parent=1 // pred_fallthru
      _
    // Predicated region
    $region18: #{tpu_custom_call.1} parent=1 // pred_check
      _
    $region19: #{tpu_custom_call.1} parent=1 // pred_check_branch
      %50 = sbr.rel (0) target = $region21
    $region20: #{tpu_custom_call.1} parent=1 // pred_region
      %51 = dma.done [#allocation3], 64
    $region21: #{tpu_custom_call.1} parent=1 // pred_fallthru
      _
    // Predicated region
    $region22: #{tpu_custom_call.1} parent=1 // pred_check
      _
    $region23: #{tpu_custom_call.1} parent=1 // pred_check_branch
      %53 = sbr.rel (0) target = $region25
    $region24: #{tpu_custom_call.1} parent=1 // pred_region
      %54 = dma.done [#allocation6], 64
    $region25: #{tpu_custom_call.1} parent=1 // pred_fallthru
      _
    // Predicated region
    $region26: #{tpu_custom_call.1} parent=1 // pred_check
      _
    $region27: #{tpu_custom_call.1} parent=1 // pred_check_branch
      %56 = sbr.rel (0) target = $region29
    $region28: #{tpu_custom_call.1} parent=1 // pred_region
      %57 = dma.done [#allocation6], 256
    $region29: #{tpu_custom_call.1} parent=1 // pred_fallthru
      _
    %v59 = vld [vmem:[#allocation2] sm:$0xf]
    %v60 = vld [vmem:[#allocation5] sm:$0xf]
    %v62 = vunpack.c.l.b16 %v60
    %v63 = vpack.c.b16 %v62, %v62
    %vm64 = vcmask 1043456
    %v67 = vsel %vm64, %v59, %v63
    %v68 = vld [vmem:[#allocation7] sm:$0xf]
    %v69 = vld [vmem:[#allocation7 + $0x4] sm:$0xf]
    %v70 = vld [vmem:[#allocation7 + $0x8] sm:$0xf]
    %v71 = vld [vmem:[#allocation7 + $0xc] sm:$0xf]
    %v72 = vld [vmem:[%s3] sm:$0x1]
    %v74 = vlaneseq
    %v75 = vshrl.u32 %v74, 7
    %v76 = vsub.s32 0, %v75
    %v77 = vrot.slane %v72, %v76
    %v83 = vunpack.c.l.b16 %v68
    %v84 = vunpack.c.l.b16 %v69
    %v85 = vunpack.c.l.b16 %v70
    %v86 = vunpack.c.l.b16 %v71
    %v87 = vpack.c.b16 %v84, %v83
    %v88 = vpack.c.b16 %v86, %v85
    %vm91 = vcmask 261120
    %v92 = vsel %vm91, %v67, 0
    %94 = vmatprep.subr.bf16.mxu0 0
    %95 = vmatpush1.bf16.msra.mxu0 %v87
    %96 = vmatprep.subr.bf16.mxu0 0
    %97 = vmatpush1.bf16.msra.mxu0 %v88
    %98 = vmatprep.subr.bf16.mxu0 0
    %99 = vmatpush1.bf16.msra.mxu0 0
    %100 = vmatprep.subr.bf16.mxu0 0
    %101 = vmatpush1.bf16.msra.mxu0 0
    %102 = vmatprep.subr.bf16.mxu0 0
    %103 = vmatpush1.bf16.msra.mxu0 0
    %104 = vmatprep.subr.bf16.mxu0 0
    %105 = vmatpush1.bf16.msra.mxu0 0
    %106 = vmatprep.subr.bf16.mxu0 0
    %107 = vmatpush1.bf16.msra.mxu0 0
    %108 = vmatprep.subr.bf16.mxu0 0
    %109 = vmatpush1.bf16.msra.mxu0 0
    %110 = vmatprep.subr.bf16.mxu0 0
    %111 = vmatpush1.bf16.msra.mxu0 0
    %112 = vmatprep.subr.bf16.mxu0 0
    %113 = vmatpush1.bf16.msra.mxu0 0
    %114 = vmatprep.subr.bf16.mxu0 0
    %115 = vmatpush1.bf16.msra.mxu0 0
    %116 = vmatprep.subr.bf16.mxu0 0
    %117 = vmatpush1.bf16.msra.mxu0 0
    %118 = vmatprep.subr.bf16.mxu0 0
    %119 = vmatpush1.bf16.msra.mxu0 0
    %120 = vmatprep.subr.bf16.mxu0 0
    %121 = vmatpush1.bf16.msra.mxu0 0
    %122 = vmatprep.subr.bf16.mxu0 0
    %123 = vmatpush1.bf16.msra.mxu0 0
    %124 = vmatprep.subr.bf16.mxu0 0
    %125 = vmatpush1.bf16.msra.mxu0 0
    %126 = vmatprep.mubr.bf16.mxu0 0
    %127 = vmatmul.mubr.bf16.gmra.mrb[0].mxu0 %v92
    %v128 = vpop.f32.mrb[0].mxu0
    %v129 = vadd.f32 %v77, %v128
    %v130 = vpop.f32.mrb[0].mxu0
    %v131 = vpop.f32.mrb[0].mxu0
    %v132 = vadd.f32 %v77, %v131
    %v133 = vpop.f32.mrb[0].mxu0
    %134 = vdwg.mxu0
    %v135 = vmax.f32 %v129, 0.0
    %v136 = vmax.f32 %v132, 0.0
    %137 = vst [vmem:[#allocation8] sm:$0xff] %v135
    %138 = vst [vmem:[#allocation9] sm:$0xff] %v136
    // Predicated region
    $region30: #{tpu_custom_call.1} parent=1 // pred_check
      _
    $region31: #{tpu_custom_call.1} parent=1 // pred_check_branch
      %140 = sbr.rel (0) target = $region33
    $region32: #{tpu_custom_call.1} parent=1 // pred_region
      %s142 = ssub.s32 128, 128
      %143 = vsyncadd [#allocation4], %s142
      %s145 = sshll.u32 [#allocation8], 4
      %s146 = int_to_ptr.vmem [resolvable:$true] %s145
      %148 = dma.vmem_to_hbm [thread:$0]  %s146, 128, %s4, [#allocation4]
    $region33: #{tpu_custom_call.1} parent=1 // pred_fallthru
      _
    // Predicated region
    $region34: #{tpu_custom_call.1} parent=1 // pred_check
      _
    $region35: #{tpu_custom_call.1} parent=1 // pred_check_branch
      %150 = sbr.rel (0) target = $region37
    $region36: #{tpu_custom_call.1} parent=1 // pred_region
      %s152 = ssub.s32 128, 128
      %153 = vsyncadd [#allocation10], %s152
      %s155 = sshll.u32 [#allocation9], 4
      %s156 = int_to_ptr.vmem [resolvable:$true] %s155
      %158 = dma.vmem_to_hbm [thread:$0]  %s156, 128, %s5, [#allocation10]
    $region37: #{tpu_custom_call.1} parent=1 // pred_fallthru
      _
    // Predicated region
    $region38: #{tpu_custom_call.1} parent=1 // pred_check
      _
    $region39: #{tpu_custom_call.1} parent=1 // pred_check_branch
      %160 = sbr.rel (0) target = $region41
    $region40: #{tpu_custom_call.1} parent=1 // pred_region
      %161 = dma.done [#allocation4], 128
    $region41: #{tpu_custom_call.1} parent=1 // pred_fallthru
      _
    // Predicated region
    $region42: #{tpu_custom_call.1} parent=1 // pred_check
      _
    $region43: #{tpu_custom_call.1} parent=1 // pred_check_branch
      %163 = sbr.rel (0) target = $region45
    $region44: #{tpu_custom_call.1} parent=1 // pred_region
      %164 = dma.done [#allocation10], 128
    $region45: #{tpu_custom_call.1} parent=1 // pred_fallthru
      _
    %165 = vsyncpa [#allocation3], 1
    %166 = vsyncpa [#allocation6], 1
    %167 = vsyncpa [#allocation4], 1
    %168 = vsyncpa [#allocation10], 1

</llo_original>
